<compile_context>
chip_gen: v7x
topology: tpu7x:2x2x1
jax: 0.10.0
libtpu: 0.0.40
codegen_flags: <defaults>
</compile_context>

<pallas_src>
import functools

import jax
import jax.numpy as jnp
from jax import lax
from jax.experimental import pallas as pl
from jax.experimental.pallas import tpu as pltpu


def _round_up(x, m):
    return ((x + m - 1) // m) * m


def sage_layer_kernel(blkmask_ref, a_ref, xk_ref, xi_ref, wl_ref, wr_ref, b_ref, drop_ref,
                      o_ref, acc_ref, *, apply_log_softmax, valid_dim):
    i = pl.program_id(0)
    k = pl.program_id(1)

    @pl.when(k == 0)
    def _():
        acc_ref[...] = jnp.zeros_like(acc_ref)

    # Mean aggregation: accumulate (A tile) @ (X tile) in f32; skip all-zero A tiles.
    @pl.when(blkmask_ref[i, k] != 0)
    def _():
        acc_ref[...] += jnp.dot(a_ref[...], xk_ref[...],
                                preferred_element_type=jnp.float32)

    @pl.when(k == pl.num_programs(1) - 1)
    def _():
        agg = acc_ref[...].astype(jnp.bfloat16)
        h = (jnp.dot(agg, wl_ref[...], preferred_element_type=jnp.float32)
             + jnp.dot(xi_ref[...], wr_ref[...], preferred_element_type=jnp.float32)
             + b_ref[...])
        h = jnp.where(h > 0, h, jnp.exp(h) - 1.0)       # F.elu (exp goes to the EUP slot)
        h = h * drop_ref[...]                           # dropout mask pre-scaled by 1/(1-p)
        if apply_log_softmax:
            col = lax.broadcasted_iota(jnp.int32, h.shape, dimension=1)
            h = jnp.where(col < valid_dim, h, -jnp.inf)  # mask padded output lanes
            m = jnp.max(h, axis=-1, keepdims=True)
            h = h - (m + jnp.log(jnp.sum(jnp.exp(h - m), axis=-1, keepdims=True)))
        o_ref[...] = h.astype(o_ref.dtype)


def _sage_layer(blk_mask, a, x, wl, wr, b, drop_mask, *, tm, tk, out_dtype,
                apply_log_softmax, valid_dim):
    n_pad = a.shape[0]
    din = x.shape[1]
    dout = wl.shape[1]
    ni, nk = n_pad // tm, n_pad // tk

    kernel = functools.partial(sage_layer_kernel,
                               apply_log_softmax=apply_log_softmax,
                               valid_dim=valid_dim)
    return pl.pallas_call(
        kernel,
        out_shape=jax.ShapeDtypeStruct((n_pad, dout), out_dtype),
        grid_spec=pltpu.PrefetchScalarGridSpec(
            num_scalar_prefetch=1,                       # per-tile block-nonzero mask (SMEM)
            grid=(ni, nk),
            in_specs=[
                pl.BlockSpec((tm, tk), lambda i, k, bm: (i, k)),      # A tile
                pl.BlockSpec((tk, din), lambda i, k, bm: (k, 0)),     # X rows for aggregation
                pl.BlockSpec((tm, din), lambda i, k, bm: (i, 0)),     # X self rows
                pl.BlockSpec((din, dout), lambda i, k, bm: (0, 0)),   # W_l (resident)
                pl.BlockSpec((din, dout), lambda i, k, bm: (0, 0)),   # W_r (resident)
                pl.BlockSpec((1, dout), lambda i, k, bm: (0, 0)),     # bias (resident)
                pl.BlockSpec((tm, dout), lambda i, k, bm: (i, 0)),    # dropout mask
            ],
            out_specs=pl.BlockSpec((tm, dout), lambda i, k, bm: (i, 0)),
            scratch_shapes=[pltpu.VMEM((tm, din), jnp.float32)],      # f32 aggregation accumulator
        ),
        compiler_params=pltpu.CompilerParams(
            dimension_semantics=("parallel", "arbitrary"),
            vmem_limit_bytes=64 * 1024 * 1024),
    )(blk_mask, a, x, x, wl, wr, b, drop_mask)


def graphsage_forward(params, x, edge_index, *, dropout_p=0.2, seed=0, training=True):
    """x: (N, in_dim) float32, edge_index: (2, E) int32 with edge_index[0]=src, edge_index[1]=dst."""
    n, in_dim = x.shape
    hidden_dim = params["w1l"].shape[1]
    out_dim = params["w2l"].shape[1]

    # Dense mean-aggregation matrix, built/normalized in f32 (assumes no duplicate edges).
    src, dst = edge_index[0], edge_index[1]
    adj = jnp.zeros((n, n), jnp.float32).at[dst, src].add(1.0)
    deg = adj.sum(axis=1, keepdims=True)
    adj = jnp.where(deg > 0, adj / jnp.maximum(deg, 1.0), 0.0)

    # Tiling / padding: 128-lane-dense feature dims, (tm, tk) tiles over A.
    tile = 256 if n >= 256 else 128
    n_pad = _round_up(n, tile)
    in_pad = _round_up(in_dim, 128)
    hid_pad = _round_up(hidden_dim, 128)
    out_pad = _round_up(out_dim, 128)

    a_pad = jnp.zeros((n_pad, n_pad), jnp.bfloat16).at[:n, :n].set(adj.astype(jnp.bfloat16))
    x_pad = jnp.zeros((n_pad, in_pad), jnp.bfloat16).at[:n, :in_dim].set(x.astype(jnp.bfloat16))

    def pad_w(w, r, c):
        return jnp.zeros((r, c), jnp.bfloat16).at[:w.shape[0], :w.shape[1]].set(
            w.astype(jnp.bfloat16))

    w1l = pad_w(params["w1l"], in_pad, hid_pad)
    w1r = pad_w(params["w1r"], in_pad, hid_pad)
    w2l = pad_w(params["w2l"], hid_pad, out_pad)
    w2r = pad_w(params["w2r"], hid_pad, out_pad)
    b1 = jnp.zeros((1, hid_pad), jnp.float32).at[:, :hidden_dim].set(
        params["b1"].reshape(1, -1).astype(jnp.float32))
    b2 = jnp.zeros((1, out_pad), jnp.float32).at[:, :out_dim].set(
        params["b2"].reshape(1, -1).astype(jnp.float32))

    # F.dropout(training=True) masks, generated host-side (no TPU-only PRNG in-kernel).
    k1, k2 = jax.random.split(jax.random.PRNGKey(seed))
    if training and dropout_p > 0.0:
        keep = 1.0 - dropout_p
        mask1 = jax.random.bernoulli(k1, keep, (n_pad, hid_pad)).astype(jnp.float32) / keep
        mask2 = jax.random.bernoulli(k2, keep, (n_pad, out_pad)).astype(jnp.float32) / keep
    else:
        mask1 = jnp.ones((n_pad, hid_pad), jnp.float32)
        mask2 = jnp.ones((n_pad, out_pad), jnp.float32)

    # Per-(row-tile, col-tile) block-nonzero mask of A for sparsity skipping inside the kernel.
    ni = nk = n_pad // tile
    blk_mask = (a_pad.reshape(ni, tile, nk, tile) != 0).any(axis=(1, 3)).astype(jnp.int32)

    # --- SAGEConv 1 -> ELU -> dropout (output kept bf16 for the layer-2 MXU matmuls) ---
    h = _sage_layer(blk_mask, a_pad, x_pad, w1l, w1r, b1, mask1,
                    tm=tile, tk=tile, out_dtype=jnp.bfloat16,
                    apply_log_softmax=False, valid_dim=hidden_dim)

    # --- SAGEConv 2 -> ELU -> dropout -> log_softmax ---
    z = _sage_layer(blk_mask, a_pad, h, w2l, w2r, b2, mask2,
                    tm=tile, tk=tile, out_dtype=jnp.float32,
                    apply_log_softmax=True, valid_dim=out_dim)

    return z[:n, :out_dim]


def init_params(key, in_dim, hidden_dim, out_dim):
    """Deterministic synthetic init. Weights stored transposed ((in, out)) for the x @ W convention."""
    ks = jax.random.split(key, 6)

    def lin(k, fan_in, fan_out):
        bound = 1.0 / jnp.sqrt(fan_in)
        return jax.random.uniform(k, (fan_in, fan_out), jnp.float32, -bound, bound)

    return {
        "w1l": lin(ks[0], in_dim, hidden_dim),
        "w1r": lin(ks[1], in_dim, hidden_dim),
        "b1": jax.random.uniform(ks[2], (1, hidden_dim), jnp.float32,
                                 -1.0 / jnp.sqrt(in_dim), 1.0 / jnp.sqrt(in_dim)),
        "w2l": lin(ks[3], hidden_dim, out_dim),
        "w2r": lin(ks[4], hidden_dim, out_dim),
        "b2": jax.random.uniform(ks[5], (1, out_dim), jnp.float32,
                                 -1.0 / jnp.sqrt(hidden_dim), 1.0 / jnp.sqrt(hidden_dim)),
        # TODO(synk): conv3 is defined in __init__ but unused (commented out) in forward; omitted.
    }


if __name__ == "__main__":
    N, IN_DIM, HIDDEN_DIM, OUT_DIM = 16, 32, 32, 8

    key = jax.random.PRNGKey(0)
    k_x, k_p = jax.random.split(key)

    x = jax.random.normal(k_x, (N, IN_DIM), jnp.float32)

    # Deterministic small graph: bidirectional ring plus skip-2 edges.
    src = []
    dst = []
    for i in range(N):
        src += [i, (i + 1) % N, i]
        dst += [(i + 1) % N, i, (i + 2) % N]
    edge_index = jnp.array([src, dst], dtype=jnp.int32)  # (2, 48)

    params = init_params(k_p, IN_DIM, HIDDEN_DIM, OUT_DIM)

    out = graphsage_forward(params, x, edge_index, dropout_p=0.2, seed=0)
    out = jax.block_until_ready(out)

    assert out.shape == (N, OUT_DIM)
    # log_softmax rows must exponentiate-sum to ~1
    row_sums = jnp.exp(out).sum(axis=-1)
    assert bool(jnp.all(jnp.abs(row_sums - 1.0) < 1e-4)), row_sums
    print("KERNEL_OK")
</pallas_src>

<mosaic_0001>
module attributes {stable_mosaic.version = 11 : i64} {
  func.func @sage_layer_kernel(%arg0: i32, %arg1: i32, %arg2: memref<1x1xi32, #tpu.memory_space<smem>>, %arg3: memref<128x128xbf16, #tpu.memory_space<vmem>>, %arg4: memref<128x128xbf16, #tpu.memory_space<vmem>>, %arg5: memref<128x128xbf16, #tpu.memory_space<vmem>>, %arg6: memref<128x128xbf16, #tpu.memory_space<vmem>>, %arg7: memref<128x128xbf16, #tpu.memory_space<vmem>>, %arg8: memref<1x128xf32, #tpu.memory_space<vmem>>, %arg9: memref<128x128xf32, #tpu.memory_space<vmem>>, %arg10: memref<128x128xbf16, #tpu.memory_space<vmem>>, %arg11: memref<128x128xf32, #tpu.memory_space<vmem>>) attributes {dimension_semantics = [#tpu.dimension_semantics<parallel>, #tpu.dimension_semantics<arbitrary>], iteration_bounds = array<i64: 1, 1>, scalar_prefetch = 1 : i64, scratch_operands = 1 : i64, tpu.core_type = #tpu.core_type<tc>, window_params = [{transform_indices = @transform_0, window_bounds = array<i64: 128, 128>}, {transform_indices = @transform_1, window_bounds = array<i64: 128, 128>}, {transform_indices = @transform_2, window_bounds = array<i64: 128, 128>}, {pipeline_mode = #tpu.pipeline_mode<synchronous>, transform_indices = @transform_3, window_bounds = array<i64: 128, 128>}, {pipeline_mode = #tpu.pipeline_mode<synchronous>, transform_indices = @transform_4, window_bounds = array<i64: 128, 128>}, {pipeline_mode = #tpu.pipeline_mode<synchronous>, transform_indices = @transform_5, window_bounds = array<i64: 1, 128>}, {transform_indices = @transform_6, window_bounds = array<i64: 128, 128>}, {transform_indices = @transform_7, window_bounds = array<i64: 128, 128>}]} {
    %c0_i32 = arith.constant 0 : i32
    %0 = arith.cmpi eq, %arg1, %c0_i32 : i32
    %1 = arith.extui %0 : i1 to i32
    %c0_i32_0 = arith.constant 0 : i32
    %2 = arith.cmpi ne, %1, %c0_i32_0 : i32
    scf.if %2 {
      %cst = arith.constant 0.000000e+00 : f32
      %12 = vector.broadcast %cst : f32 to vector<128x128xf32>
      %c0 = arith.constant 0 : index
      %c0_5 = arith.constant 0 : index
      %13 = vector.load %arg11[%c0, %c0_5] : memref<128x128xf32, #tpu.memory_space<vmem>>, vector<128x128xf32>
      tpu.vector_store %arg11[%c0, %c0_5], %12 {strides = array<i32>} : memref<128x128xf32, #tpu.memory_space<vmem>>, vector<128x128xf32>,
    } else {
    }
    %3 = arith.index_cast %arg0 : i32 to index
    %4 = arith.index_cast %arg1 : i32 to index
    %5 = memref.load %arg2[%3, %4] : memref<1x1xi32, #tpu.memory_space<smem>>
    %c0_i32_1 = arith.constant 0 : i32
    %6 = arith.cmpi ne, %5, %c0_i32_1 : i32
    %7 = arith.extui %6 : i1 to i32
    %c0_i32_2 = arith.constant 0 : i32
    %8 = arith.cmpi ne, %7, %c0_i32_2 : i32
    scf.if %8 {
      %c0 = arith.constant 0 : index
      %c0_5 = arith.constant 0 : index
      %12 = vector.load %arg11[%c0, %c0_5] : memref<128x128xf32, #tpu.memory_space<vmem>>, vector<128x128xf32>
      %c0_6 = arith.constant 0 : index
      %c0_7 = arith.constant 0 : index
      %13 = vector.load %arg3[%c0_6, %c0_7] : memref<128x128xbf16, #tpu.memory_space<vmem>>, vector<128x128xbf16>
      %c0_8 = arith.constant 0 : index
      %c0_9 = arith.constant 0 : index
      %14 = vector.load %arg4[%c0_8, %c0_9] : memref<128x128xbf16, #tpu.memory_space<vmem>>, vector<128x128xbf16>
      %cst = arith.constant dense<0.000000e+00> : vector<128x128xf32>
      %15 = tpu.matmul %13, %14, %cst {dimension_numbers = #tpu.dot_dimension_numbers<[1], [0], [0], [1], [0, 0, 1, 1], [], []>} : vector<128x128xbf16>, vector<128x128xbf16>, vector<128x128xf32> -> vector<128x128xf32>
      %16 = arith.addf %12, %15 : vector<128x128xf32>
      %c0_10 = arith.constant 0 : index
      %c0_11 = arith.constant 0 : index
      %17 = vector.load %arg11[%c0_10, %c0_11] : memref<128x128xf32, #tpu.memory_space<vmem>>, vector<128x128xf32>
      tpu.vector_store %arg11[%c0_10, %c0_11], %16 {strides = array<i32>} : memref<128x128xf32, #tpu.memory_space<vmem>>, vector<128x128xf32>,
    } else {
    }
    %c0_i32_3 = arith.constant 0 : i32
    %9 = arith.cmpi eq, %arg1, %c0_i32_3 : i32
    %10 = arith.extui %9 : i1 to i32
    %c0_i32_4 = arith.constant 0 : i32
    %11 = arith.cmpi ne, %10, %c0_i32_4 : i32
    scf.if %11 {
      %c0 = arith.constant 0 : index
      %c0_5 = arith.constant 0 : index
      %12 = vector.load %arg11[%c0, %c0_5] : memref<128x128xf32, #tpu.memory_space<vmem>>, vector<128x128xf32>
      %13 = arith.truncf %12 : vector<128x128xf32> to vector<128x128xbf16>
      %c0_6 = arith.constant 0 : index
      %c0_7 = arith.constant 0 : index
      %14 = vector.load %arg6[%c0_6, %c0_7] : memref<128x128xbf16, #tpu.memory_space<vmem>>, vector<128x128xbf16>
      %cst = arith.constant dense<0.000000e+00> : vector<128x128xf32>
      %15 = tpu.matmul %13, %14, %cst {dimension_numbers = #tpu.dot_dimension_numbers<[1], [0], [0], [1], [0, 0, 1, 1], [], []>} : vector<128x128xbf16>, vector<128x128xbf16>, vector<128x128xf32> -> vector<128x128xf32>
      %c0_8 = arith.constant 0 : index
      %c0_9 = arith.constant 0 : index
      %16 = vector.load %arg5[%c0_8, %c0_9] : memref<128x128xbf16, #tpu.memory_space<vmem>>, vector<128x128xbf16>
      %c0_10 = arith.constant 0 : index
      %c0_11 = arith.constant 0 : index
      %17 = vector.load %arg7[%c0_10, %c0_11] : memref<128x128xbf16, #tpu.memory_space<vmem>>, vector<128x128xbf16>
      %cst_12 = arith.constant dense<0.000000e+00> : vector<128x128xf32>
      %18 = tpu.matmul %16, %17, %cst_12 {dimension_numbers = #tpu.dot_dimension_numbers<[1], [0], [0], [1], [0, 0, 1, 1], [], []>} : vector<128x128xbf16>, vector<128x128xbf16>, vector<128x128xf32> -> vector<128x128xf32>
      %19 = arith.addf %15, %18 : vector<128x128xf32>
      %c0_13 = arith.constant 0 : index
      %c0_14 = arith.constant 0 : index
      %20 = vector.load %arg8[%c0_13, %c0_14] : memref<1x128xf32, #tpu.memory_space<vmem>>, vector<1x128xf32>
      %21 = vector.broadcast %20 : vector<1x128xf32> to vector<128x128xf32>
      %22 = arith.addf %19, %21 : vector<128x128xf32>
      %cst_15 = arith.constant 0.000000e+00 : f32
      %23 = vector.broadcast %cst_15 : f32 to vector<128x128xf32>
      %24 = arith.cmpf ogt, %22, %23 : vector<128x128xf32>
      %25 = math.exp %22 : vector<128x128xf32>
      %cst_16 = arith.constant 1.000000e+00 : f32
      %26 = vector.broadcast %cst_16 : f32 to vector<128x128xf32>
      %27 = arith.subf %25, %26 : vector<128x128xf32>
      %28 = arith.select %24, %22, %27 : vector<128x128xi1>, vector<128x128xf32>
      %c0_17 = arith.constant 0 : index
      %c0_18 = arith.constant 0 : index
      %29 = vector.load %arg9[%c0_17, %c0_18] : memref<128x128xf32, #tpu.memory_space<vmem>>, vector<128x128xf32>
      %30 = arith.mulf %28, %29 : vector<128x128xf32>
      %31 = arith.truncf %30 : vector<128x128xf32> to vector<128x128xbf16>
      %c0_19 = arith.constant 0 : index
      %c0_20 = arith.constant 0 : index
      %32 = vector.load %arg10[%c0_19, %c0_20] : memref<128x128xbf16, #tpu.memory_space<vmem>>, vector<128x128xbf16>
      tpu.vector_store %arg10[%c0_19, %c0_20], %31 {strides = array<i32>} : memref<128x128xbf16, #tpu.memory_space<vmem>>, vector<128x128xbf16>,
    } else {
    }
    return
  }
  func.func @transform_0(%arg0: i32, %arg1: i32, %arg2: memref<1x1xi32, #tpu.memory_space<smem>>) -> (i32, i32) {
    %c0_i32 = arith.constant 0 : i32
    return %arg0, %arg1 : i32, i32
  }
  func.func @transform_1(%arg0: i32, %arg1: i32, %arg2: memref<1x1xi32, #tpu.memory_space<smem>>) -> (i32, i32) {
    %c0_i32 = arith.constant 0 : i32
    %c0_i32_0 = arith.constant 0 : i32
    return %arg1, %c0_i32 : i32, i32
  }
  func.func @transform_2(%arg0: i32, %arg1: i32, %arg2: memref<1x1xi32, #tpu.memory_space<smem>>) -> (i32, i32) {
    %c0_i32 = arith.constant 0 : i32
    %c0_i32_0 = arith.constant 0 : i32
    return %arg0, %c0_i32 : i32, i32
  }
  func.func @transform_3(%arg0: i32, %arg1: i32, %arg2: memref<1x1xi32, #tpu.memory_space<smem>>) -> (i32, i32) {
    %c0_i32 = arith.constant 0 : i32
    %c0_i32_0 = arith.constant 0 : i32
    %c0_i32_1 = arith.constant 0 : i32
    return %c0_i32, %c0_i32_0 : i32, i32
  }
  func.func @transform_4(%arg0: i32, %arg1: i32, %arg2: memref<1x1xi32, #tpu.memory_space<smem>>) -> (i32, i32) {
    %c0_i32 = arith.constant 0 : i32
    %c0_i32_0 = arith.constant 0 : i32
    %c0_i32_1 = arith.constant 0 : i32
    return %c0_i32, %c0_i32_0 : i32, i32
  }
  func.func @transform_5(%arg0: i32, %arg1: i32, %arg2: memref<1x1xi32, #tpu.memory_space<smem>>) -> (i32, i32) {
    %c0_i32 = arith.constant 0 : i32
    %c0_i32_0 = arith.constant 0 : i32
    %c0_i32_1 = arith.constant 0 : i32
    return %c0_i32, %c0_i32_0 : i32, i32
  }
  func.func @transform_6(%arg0: i32, %arg1: i32, %arg2: memref<1x1xi32, #tpu.memory_space<smem>>) -> (i32, i32) {
    %c0_i32 = arith.constant 0 : i32
    %c0_i32_0 = arith.constant 0 : i32
    return %arg0, %c0_i32 : i32, i32
  }
  func.func @transform_7(%arg0: i32, %arg1: i32, %arg2: memref<1x1xi32, #tpu.memory_space<smem>>) -> (i32, i32) {
    %c0_i32 = arith.constant 0 : i32
    %c0_i32_0 = arith.constant 0 : i32
    return %arg0, %c0_i32 : i32, i32
  }
}

</mosaic_0001>

<llo_original>
// kernel: tpu_custom_call.1
$region0: #{tpu_custom_call.1}
  #allocation0 [shape = 'u32[]', space=smem, size = 0x4, offset = 0x4, fixed_abs, tag = 'smem constant byte address 0x4 - core index']
  #allocation1 [shape = 'u32[144,128]{1,0:T(1,128)}', space=vmem, size = 0x12000, scoped, tag = 'internal scratch']
  #allocation2 [shape = 'f32[128,128]{1,0:T(8,128)}', space=vmem, size = 0x10000, scoped, tag = 'scratch operand']
  #allocation3 [shape = 's32[1]{0}', space=sflag, size = 0x4, scoped, tag = 'scoped memory for tpu_custom_call.1']
  #allocation4 [shape = 's32[1,1]{1,0:T(1,128)S(6)}', space=smem, size = 0x200, scoped, tag = 'prefetched SMEM operand 0']
  %s0 = inlined_call_operand.<no memory space> [shape: s32[1,1], index: 0, kind: input, shape index: {}]
  %s1 = inlined_call_operand.hbm [shape: bf16[128,128], index: 1, kind: input, shape index: {}]
  %s2 = inlined_call_operand.hbm [shape: bf16[128,128], index: 2, kind: input, shape index: {}]
  %s3 = inlined_call_operand.hbm [shape: bf16[128,128], index: 3, kind: input, shape index: {}]
  %s4 = inlined_call_operand.hbm [shape: bf16[128,128], index: 4, kind: input, shape index: {}]
  %s5 = inlined_call_operand.hbm [shape: bf16[128,128], index: 5, kind: input, shape index: {}]
  %s6 = inlined_call_operand.hbm [shape: f32[1,128], index: 6, kind: input, shape index: {}]
  %s7 = inlined_call_operand.hbm [shape: f32[128,128], index: 7, kind: input, shape index: {}]
  %s8 = inlined_call_operand.hbm [shape: bf16[128,128], index: 8, kind: output, shape index: {}]
  %s9 = sld [smem:[#allocation0]]
  $region78: #{tpu_custom_call.1} parent=0
    _
  %s11 = ssub.s32 1, %s9
  %s12 = scalar_select 0, %s11, %s9
  %13 = sst [smem:[#allocation4]] %s0
  $region1: #{tpu_custom_call.1} parent=0
    #allocation5 [shape = 'u8[32768]{0}', space=vmem, size = 0x8000, scoped, tag = 'input window, operand 1, single buffered']
    #allocation6 [shape = 's32[1]{0}', space=sflag, size = 0x4, scoped, tag = 'scoped memory for tpu_custom_call.1']
    #allocation7 [shape = 's32[1]{0}', space=sflag, size = 0x4, scoped, tag = 'scoped memory for tpu_custom_call.1']
    #allocation8 [shape = 'u8[32768]{0}', space=vmem, size = 0x8000, scoped, tag = 'input window, operand 2, single buffered']
    #allocation9 [shape = 's32[1]{0}', space=sflag, size = 0x4, scoped, tag = 'scoped memory for tpu_custom_call.1']
    #allocation10 [shape = 'u8[32768]{0}', space=vmem, size = 0x8000, scoped, tag = 'input window, operand 3, single buffered']
    #allocation11 [shape = 'u8[32768]{0}', space=vmem, size = 0x8000, scoped, tag = 'input window, operand 4, single buffered']
    #allocation12 [shape = 's32[1]{0}', space=sflag, size = 0x4, scoped, tag = 'scoped memory for tpu_custom_call.1']
    #allocation13 [shape = 'u8[32768]{0}', space=vmem, size = 0x8000, scoped, tag = 'input window, operand 5, single buffered']
    #allocation14 [shape = 'u8[512]{0}', space=vmem, size = 0x400, scoped, tag = 'input window, operand 6, single buffered']
    #allocation15 [shape = 's32[1]{0}', space=sflag, size = 0x4, scoped, tag = 'scoped memory for tpu_custom_call.1']
    #allocation16 [shape = 'u8[65536]{0}', space=vmem, size = 0x10000, scoped, tag = 'input window, operand 7, single buffered']
    #allocation17 [shape = 'u8[32768]{0}', space=vmem, size = 0x8000, scoped, tag = 'output window, operand 0, single buffered']
    %14 = vsyncpa [#allocation6], 0
    %15 = vsyncpa [#allocation9], 0
    %16 = vsyncpa [#allocation12], 0
    %17 = vsyncpa [#allocation15], 0
    %18 = vsyncpa [#allocation7], 0
    // Predicated region
    $region2: #{tpu_custom_call.1} parent=1 // pred_check
      _
    $region3: #{tpu_custom_call.1} parent=1 // pred_check_branch
      %20 = sbr.rel (0) target = $region5
    $region4: #{tpu_custom_call.1} parent=1 // pred_region
      %s22 = ssub.s32 1024, 1024
      %23 = vsyncadd [#allocation6], %s22
      %s24 = sshll.u32 [#allocation5], 4
      %s25 = int_to_ptr.vmem [resolvable:$true] %s24
      %30 = dma.hbm_to_vmem [thread:$0]  %s1, 1024, %s25, [#allocation6], 64, 64, 4
    $region5: #{tpu_custom_call.1} parent=1 // pred_fallthru
      _
    // Predicated region
    $region6: #{tpu_custom_call.1} parent=1 // pred_check
      _
    $region7: #{tpu_custom_call.1} parent=1 // pred_check_branch
      %32 = sbr.rel (0) target = $region9
    $region8: #{tpu_custom_call.1} parent=1 // pred_region
      %s34 = ssub.s32 1024, 1024
      %35 = vsyncadd [#allocation9], %s34
      %s36 = sshll.u32 [#allocation8], 4
      %s37 = int_to_ptr.vmem [resolvable:$true] %s36
      %42 = dma.hbm_to_vmem [thread:$0]  %s2, 1024, %s37, [#allocation9], 64, 64, 4
    $region9: #{tpu_custom_call.1} parent=1 // pred_fallthru
      _
    // Predicated region
    $region10: #{tpu_custom_call.1} parent=1 // pred_check
      _
    $region11: #{tpu_custom_call.1} parent=1 // pred_check_branch
      %44 = sbr.rel (0) target = $region13
    $region12: #{tpu_custom_call.1} parent=1 // pred_region
      %s46 = ssub.s32 1024, 1024
      %47 = vsyncadd [#allocation9], %s46
      %s48 = sshll.u32 [#allocation10], 4
      %s49 = int_to_ptr.vmem [resolvable:$true] %s48
      %54 = dma.hbm_to_vmem [thread:$0]  %s3, 1024, %s49, [#allocation9], 64, 64, 4
    $region13: #{tpu_custom_call.1} parent=1 // pred_fallthru
      _
    // Predicated region
    $region14: #{tpu_custom_call.1} parent=1 // pred_check
      _
    $region15: #{tpu_custom_call.1} parent=1 // pred_check_branch
      %56 = sbr.rel (0) target = $region17
    $region16: #{tpu_custom_call.1} parent=1 // pred_region
      %s58 = ssub.s32 1024, 1024
      %59 = vsyncadd [#allocation12], %s58
      %s60 = sshll.u32 [#allocation11], 4
      %s61 = int_to_ptr.vmem [resolvable:$true] %s60
      %66 = dma.hbm_to_vmem [thread:$0]  %s4, 1024, %s61, [#allocation12], 64, 64, 4
    $region17: #{tpu_custom_call.1} parent=1 // pred_fallthru
      _
    // Predicated region
    $region18: #{tpu_custom_call.1} parent=1 // pred_check
      _
    $region19: #{tpu_custom_call.1} parent=1 // pred_check_branch
      %68 = sbr.rel (0) target = $region21
    $region20: #{tpu_custom_call.1} parent=1 // pred_region
      %s70 = ssub.s32 1024, 1024
      %71 = vsyncadd [#allocation12], %s70
      %s72 = sshll.u32 [#allocation13], 4
      %s73 = int_to_ptr.vmem [resolvable:$true] %s72
      %78 = dma.hbm_to_vmem [thread:$0]  %s5, 1024, %s73, [#allocation12], 64, 64, 4
    $region21: #{tpu_custom_call.1} parent=1 // pred_fallthru
      _
    // Predicated region
    $region22: #{tpu_custom_call.1} parent=1 // pred_check
      _
    $region23: #{tpu_custom_call.1} parent=1 // pred_check_branch
      %80 = sbr.rel (0) target = $region25
    $region24: #{tpu_custom_call.1} parent=1 // pred_region
      %s82 = ssub.s32 16, 16
      %83 = vsyncadd [#allocation15], %s82
      %s85 = sshll.u32 [#allocation14], 4
      %s86 = int_to_ptr.vmem [resolvable:$true] %s85
      %88 = dma.hbm_to_vmem [thread:$0]  %s6, 16, %s86, [#allocation15]
    $region25: #{tpu_custom_call.1} parent=1 // pred_fallthru
      _
    // Predicated region
    $region26: #{tpu_custom_call.1} parent=1 // pred_check
      _
    $region27: #{tpu_custom_call.1} parent=1 // pred_check_branch
      %90 = sbr.rel (0) target = $region29
    $region28: #{tpu_custom_call.1} parent=1 // pred_region
      %s92 = ssub.s32 2048, 2048
      %93 = vsyncadd [#allocation15], %s92
      %s94 = sshll.u32 [#allocation16], 4
      %s95 = int_to_ptr.vmem [resolvable:$true] %s94
      %100 = dma.hbm_to_vmem [thread:$0]  %s7, 2048, %s95, [#allocation15], 128, 128, 8
    $region29: #{tpu_custom_call.1} parent=1 // pred_fallthru
      _
    // Predicated region
    $region30: #{tpu_custom_call.1} parent=1 // pred_check
      _
    $region31: #{tpu_custom_call.1} parent=1 // pred_check_branch
      %102 = sbr.rel (0) target = $region33
    $region32: #{tpu_custom_call.1} parent=1 // pred_region
      %103 = dma.done [#allocation6], 1024
    $region33: #{tpu_custom_call.1} parent=1 // pred_fallthru
      _
    // Predicated region
    $region34: #{tpu_custom_call.1} parent=1 // pred_check
      _
    $region35: #{tpu_custom_call.1} parent=1 // pred_check_branch
      %105 = sbr.rel (0) target = $region37
    $region36: #{tpu_custom_call.1} parent=1 // pred_region
      %106 = dma.done [#allocation9], 1024
    $region37: #{tpu_custom_call.1} parent=1 // pred_fallthru
      _
    // Predicated region
    $region38: #{tpu_custom_call.1} parent=1 // pred_check
      _
    $region39: #{tpu_custom_call.1} parent=1 // pred_check_branch
      %108 = sbr.rel (0) target = $region41
    $region40: #{tpu_custom_call.1} parent=1 // pred_region
      %109 = dma.done [#allocation9], 1024
    $region41: #{tpu_custom_call.1} parent=1 // pred_fallthru
      _
    // Predicated region
    $region42: #{tpu_custom_call.1} parent=1 // pred_check
      _
    $region43: #{tpu_custom_call.1} parent=1 // pred_check_branch
      %111 = sbr.rel (0) target = $region45
    $region44: #{tpu_custom_call.1} parent=1 // pred_region
      %112 = dma.done [#allocation12], 1024
    $region45: #{tpu_custom_call.1} parent=1 // pred_fallthru
      _
    // Predicated region
    $region46: #{tpu_custom_call.1} parent=1 // pred_check
      _
    $region47: #{tpu_custom_call.1} parent=1 // pred_check_branch
      %114 = sbr.rel (0) target = $region49
    $region48: #{tpu_custom_call.1} parent=1 // pred_region
      %115 = dma.done [#allocation12], 1024
    $region49: #{tpu_custom_call.1} parent=1 // pred_fallthru
      _
    // Predicated region
    $region50: #{tpu_custom_call.1} parent=1 // pred_check
      _
    $region51: #{tpu_custom_call.1} parent=1 // pred_check_branch
      %117 = sbr.rel (0) target = $region53
    $region52: #{tpu_custom_call.1} parent=1 // pred_region
      %118 = dma.done [#allocation15], 16
    $region53: #{tpu_custom_call.1} parent=1 // pred_fallthru
      _
    // Predicated region
    $region54: #{tpu_custom_call.1} parent=1 // pred_check
      _
    $region55: #{tpu_custom_call.1} parent=1 // pred_check_branch
      %120 = sbr.rel (0) target = $region57
    $region56: #{tpu_custom_call.1} parent=1 // pred_region
      %121 = dma.done [#allocation15], 2048
    $region57: #{tpu_custom_call.1} parent=1 // pred_fallthru
      _
    %p123 = scmp.eq.s32.totalorder 0, 0
    // Predicated region
    $region58: #{tpu_custom_call.1} parent=1 // pred_check
      %p124 = pneg %p123
    $region59: #{tpu_custom_call.1} parent=1 // pred_check_branch
      %126 = sbr.rel (%p124) target = $region61
    $region60: #{tpu_custom_call.1} parent=1 // pred_region
      %127 = vst [vmem:[#allocation2] sm:$0xff] 0.0
      %128 = vst [vmem:[#allocation2 + $0x8] sm:$0xff] 0.0
      %129 = vst [vmem:[#allocation2 + $0x10] sm:$0xff] 0.0
      %130 = vst [vmem:[#allocation2 + $0x18] sm:$0xff] 0.0
      %131 = vst [vmem:[#allocation2 + $0x20] sm:$0xff] 0.0
      %132 = vst [vmem:[#allocation2 + $0x28] sm:$0xff] 0.0
      %133 = vst [vmem:[#allocation2 + $0x30] sm:$0xff] 0.0
      %134 = vst [vmem:[#allocation2 + $0x38] sm:$0xff] 0.0
      %135 = vst [vmem:[#allocation2 + $0x40] sm:$0xff] 0.0
      %136 = vst [vmem:[#allocation2 + $0x48] sm:$0xff] 0.0
      %137 = vst [vmem:[#allocation2 + $0x50] sm:$0xff] 0.0
      %138 = vst [vmem:[#allocation2 + $0x58] sm:$0xff] 0.0
      %139 = vst [vmem:[#allocation2 + $0x60] sm:$0xff] 0.0
      %140 = vst [vmem:[#allocation2 + $0x68] sm:$0xff] 0.0
      %141 = vst [vmem:[#allocation2 + $0x70] sm:$0xff] 0.0
      %142 = vst [vmem:[#allocation2 + $0x78] sm:$0xff] 0.0
    $region61: #{tpu_custom_call.1} parent=1 // pred_fallthru
      _
    %s143 = sadd.s32 0, 0
    %s144 = smul.u32 %s143, 128
    %s145 = sadd.s32 %s144, 0
    %s146 = sld [smem:[#allocation4 + %s145]]
    %p147 = scmp.ne.s32.totalorder %s146, 0
    // Predicated region
    $region62: #{tpu_custom_call.1} parent=1 // pred_check
      %p148 = pneg %p147
    $region63: #{tpu_custom_call.1} parent=1 // pred_check_branch
      %150 = sbr.rel (%p148) target = $region65
    $region64: #{tpu_custom_call.1} parent=1 // pred_region
      %v151 = vld [vmem:[#allocation2] sm:$0xff]
      %v152 = vld [vmem:[#allocation2 + $0x8] sm:$0xff]
      %v153 = vld [vmem:[#allocation2 + $0x10] sm:$0xff]
      %v154 = vld [vmem:[#allocation2 + $0x18] sm:$0xff]
      %v155 = vld [vmem:[#allocation2 + $0x20] sm:$0xff]
      %v156 = vld [vmem:[#allocation2 + $0x28] sm:$0xff]
      %v157 = vld [vmem:[#allocation2 + $0x30] sm:$0xff]
      %v158 = vld [vmem:[#allocation2 + $0x38] sm:$0xff]
      %v159 = vld [vmem:[#allocation2 + $0x40] sm:$0xff]
      %v160 = vld [vmem:[#allocation2 + $0x48] sm:$0xff]
      %v161 = vld [vmem:[#allocation2 + $0x50] sm:$0xff]
      %v162 = vld [vmem:[#allocation2 + $0x58] sm:$0xff]
      %v163 = vld [vmem:[#allocation2 + $0x60] sm:$0xff]
      %v164 = vld [vmem:[#allocation2 + $0x68] sm:$0xff]
      %v165 = vld [vmem:[#allocation2 + $0x70] sm:$0xff]
      %v166 = vld [vmem:[#allocation2 + $0x78] sm:$0xff]
      %v167 = vld [vmem:[#allocation5] sm:$0xf]
      %v168 = vld [vmem:[#allocation5 + $0x4] sm:$0xf]
      %v169 = vld [vmem:[#allocation5 + $0x8] sm:$0xf]
      %v170 = vld [vmem:[#allocation5 + $0xc] sm:$0xf]
      %v171 = vld [vmem:[#allocation5 + $0x10] sm:$0xf]
      %v172 = vld [vmem:[#allocation5 + $0x14] sm:$0xf]
      %v173 = vld [vmem:[#allocation5 + $0x18] sm:$0xf]
      %v174 = vld [vmem:[#allocation5 + $0x1c] sm:$0xf]
      %v175 = vld [vmem:[#allocation5 + $0x20] sm:$0xf]
      %v176 = vld [vmem:[#allocation5 + $0x24] sm:$0xf]
      %v177 = vld [vmem:[#allocation5 + $0x28] sm:$0xf]
      %v178 = vld [vmem:[#allocation5 + $0x2c] sm:$0xf]
      %v179 = vld [vmem:[#allocation5 + $0x30] sm:$0xf]
      %v180 = vld [vmem:[#allocation5 + $0x34] sm:$0xf]
      %v181 = vld [vmem:[#allocation5 + $0x38] sm:$0xf]
      %v182 = vld [vmem:[#allocation5 + $0x3c] sm:$0xf]
      %v183 = vld [vmem:[#allocation8] sm:$0xf]
      %v184 = vld [vmem:[#allocation8 + $0x4] sm:$0xf]
      %v185 = vld [vmem:[#allocation8 + $0x8] sm:$0xf]
      %v186 = vld [vmem:[#allocation8 + $0xc] sm:$0xf]
      %v187 = vld [vmem:[#allocation8 + $0x10] sm:$0xf]
      %v188 = vld [vmem:[#allocation8 + $0x14] sm:$0xf]
      %v189 = vld [vmem:[#allocation8 + $0x18] sm:$0xf]
      %v190 = vld [vmem:[#allocation8 + $0x1c] sm:$0xf]
      %v191 = vld [vmem:[#allocation8 + $0x20] sm:$0xf]
      %v192 = vld [vmem:[#allocation8 + $0x24] sm:$0xf]
      %v193 = vld [vmem:[#allocation8 + $0x28] sm:$0xf]
      %v194 = vld [vmem:[#allocation8 + $0x2c] sm:$0xf]
      %v195 = vld [vmem:[#allocation8 + $0x30] sm:$0xf]
      %v196 = vld [vmem:[#allocation8 + $0x34] sm:$0xf]
      %v197 = vld [vmem:[#allocation8 + $0x38] sm:$0xf]
      %v198 = vld [vmem:[#allocation8 + $0x3c] sm:$0xf]
      %v215 = vunpack.c.l.b16 %v167
      %v216 = vunpack.c.l.b16 %v168
      %v217 = vunpack.c.l.b16 %v169
      %v218 = vunpack.c.l.b16 %v170
      %v219 = vunpack.c.l.b16 %v171
      %v220 = vunpack.c.l.b16 %v172
      %v221 = vunpack.c.l.b16 %v173
      %v222 = vunpack.c.l.b16 %v174
      %v223 = vunpack.c.l.b16 %v175
      %v224 = vunpack.c.l.b16 %v176
      %v225 = vunpack.c.l.b16 %v177
      %v226 = vunpack.c.l.b16 %v178
      %v227 = vunpack.c.l.b16 %v179
      %v228 = vunpack.c.l.b16 %v180
      %v229 = vunpack.c.l.b16 %v181
      %v230 = vunpack.c.l.b16 %v182
      %v231 = vpack.c.b16 %v216, %v215
      %v232 = vpack.c.b16 %v218, %v217
      %v233 = vpack.c.b16 %v220, %v219
      %v234 = vpack.c.b16 %v222, %v221
      %v235 = vpack.c.b16 %v224, %v223
      %v236 = vpack.c.b16 %v226, %v225
      %v237 = vpack.c.b16 %v228, %v227
      %v238 = vpack.c.b16 %v230, %v229
      %v263 = vunpack.c.l.b16 %v183
      %v264 = vunpack.c.l.b16 %v184
      %v265 = vunpack.c.l.b16 %v185
      %v266 = vunpack.c.l.b16 %v186
      %v267 = vunpack.c.l.b16 %v187
      %v268 = vunpack.c.l.b16 %v188
      %v269 = vunpack.c.l.b16 %v189
      %v270 = vunpack.c.l.b16 %v190
      %v271 = vunpack.c.l.b16 %v191
      %v272 = vunpack.c.l.b16 %v192
      %v273 = vunpack.c.l.b16 %v193
      %v274 = vunpack.c.l.b16 %v194
      %v275 = vunpack.c.l.b16 %v195
      %v276 = vunpack.c.l.b16 %v196
      %v277 = vunpack.c.l.b16 %v197
      %v278 = vunpack.c.l.b16 %v198
      %v279 = vpack.c.b16 %v264, %v263
      %v280 = vpack.c.b16 %v266, %v265
      %v281 = vpack.c.b16 %v268, %v267
      %v282 = vpack.c.b16 %v270, %v269
      %v283 = vpack.c.b16 %v272, %v271
      %v284 = vpack.c.b16 %v274, %v273
      %v285 = vpack.c.b16 %v276, %v275
      %v286 = vpack.c.b16 %v278, %v277
      %295 = vmatprep.subr.bf16.mxu0 0
      %296 = vmatpush1.bf16.msra.mxu0 %v279
      %297 = vmatprep.subr.bf16.mxu0 0
      %298 = vmatpush1.bf16.msra.mxu0 %v280
      %299 = vmatprep.subr.bf16.mxu0 0
      %300 = vmatpush1.bf16.msra.mxu0 %v281
      %301 = vmatprep.subr.bf16.mxu0 0
      %302 = vmatpush1.bf16.msra.mxu0 %v282
      %303 = vmatprep.subr.bf16.mxu0 0
      %304 = vmatpush1.bf16.msra.mxu0 %v283
      %305 = vmatprep.subr.bf16.mxu0 0
      %306 = vmatpush1.bf16.msra.mxu0 %v284
      %307 = vmatprep.subr.bf16.mxu0 0
      %308 = vmatpush1.bf16.msra.mxu0 %v285
      %309 = vmatprep.subr.bf16.mxu0 0
      %310 = vmatpush1.bf16.msra.mxu0 %v286
      %311 = vmatprep.subr.bf16.mxu0 0
      %312 = vmatpush1.bf16.msra.mxu0 0
      %313 = vmatprep.subr.bf16.mxu0 0
      %314 = vmatpush1.bf16.msra.mxu0 0
      %315 = vmatprep.subr.bf16.mxu0 0
      %316 = vmatpush1.bf16.msra.mxu0 0
      %317 = vmatprep.subr.bf16.mxu0 0
      %318 = vmatpush1.bf16.msra.mxu0 0
      %319 = vmatprep.subr.bf16.mxu0 0
      %320 = vmatpush1.bf16.msra.mxu0 0
      %321 = vmatprep.subr.bf16.mxu0 0
      %322 = vmatpush1.bf16.msra.mxu0 0
      %323 = vmatprep.subr.bf16.mxu0 0
      %324 = vmatpush1.bf16.msra.mxu0 0
      %325 = vmatprep.subr.bf16.mxu0 0
      %326 = vmatpush1.bf16.msra.mxu0 0
      %327 = vmatprep.mubr.bf16.mxu0 0
      %328 = vmatmul.mubr.bf16.gmra.mrb[0].mxu0 %v231
      %v329 = vpop.f32.mrb[0].mxu0
      %v330 = vadd.f32 0.0, %v329
      %v331 = vpop.f32.mrb[0].mxu0
      %v332 = vpop.f32.mrb[0].mxu0
      %v333 = vadd.f32 0.0, %v332
      %v334 = vpop.f32.mrb[0].mxu0
      %335 = vmatprep.mubr.bf16.mxu0 0
      %336 = vmatmul.mubr.bf16.gmra.mrb[0].mxu0 %v232
      %v337 = vpop.f32.mrb[0].mxu0
      %v338 = vadd.f32 0.0, %v337
      %v339 = vpop.f32.mrb[0].mxu0
      %v340 = vpop.f32.mrb[0].mxu0
      %v341 = vadd.f32 0.0, %v340
      %v342 = vpop.f32.mrb[0].mxu0
      %343 = vmatprep.mubr.bf16.mxu0 0
      %344 = vmatmul.mubr.bf16.gmra.mrb[0].mxu0 %v233
      %v345 = vpop.f32.mrb[0].mxu0
      %v346 = vadd.f32 0.0, %v345
      %v347 = vpop.f32.mrb[0].mxu0
      %v348 = vpop.f32.mrb[0].mxu0
      %v349 = vadd.f32 0.0, %v348
      %v350 = vpop.f32.mrb[0].mxu0
      %351 = vmatprep.mubr.bf16.mxu0 0
      %352 = vmatmul.mubr.bf16.gmra.mrb[0].mxu0 %v234
      %v353 = vpop.f32.mrb[0].mxu0
      %v354 = vadd.f32 0.0, %v353
      %v355 = vpop.f32.mrb[0].mxu0
      %v356 = vpop.f32.mrb[0].mxu0
      %v357 = vadd.f32 0.0, %v356
      %v358 = vpop.f32.mrb[0].mxu0
      %359 = vmatprep.mubr.bf16.mxu0 0
      %360 = vmatmul.mubr.bf16.gmra.mrb[0].mxu0 %v235
      %v361 = vpop.f32.mrb[0].mxu0
      %v362 = vadd.f32 0.0, %v361
      %v363 = vpop.f32.mrb[0].mxu0
      %v364 = vpop.f32.mrb[0].mxu0
      %v365 = vadd.f32 0.0, %v364
      %v366 = vpop.f32.mrb[0].mxu0
      %367 = vmatprep.mubr.bf16.mxu0 0
      %368 = vmatmul.mubr.bf16.gmra.mrb[0].mxu0 %v236
      %v369 = vpop.f32.mrb[0].mxu0
      %v370 = vadd.f32 0.0, %v369
      %v371 = vpop.f32.mrb[0].mxu0
      %v372 = vpop.f32.mrb[0].mxu0
      %v373 = vadd.f32 0.0, %v372
      %v374 = vpop.f32.mrb[0].mxu0
      %375 = vmatprep.mubr.bf16.mxu0 0
      %376 = vmatmul.mubr.bf16.gmra.mrb[0].mxu0 %v237
      %v377 = vpop.f32.mrb[0].mxu0
      %v378 = vadd.f32 0.0, %v377
      %v379 = vpop.f32.mrb[0].mxu0
      %v380 = vpop.f32.mrb[0].mxu0
      %v381 = vadd.f32 0.0, %v380
      %v382 = vpop.f32.mrb[0].mxu0
      %383 = vmatprep.mubr.bf16.mxu0 0
      %384 = vmatmul.mubr.bf16.gmra.mrb[0].mxu0 %v238
      %v385 = vpop.f32.mrb[0].mxu0
      %v386 = vadd.f32 0.0, %v385
      %v387 = vpop.f32.mrb[0].mxu0
      %v388 = vpop.f32.mrb[0].mxu0
      %v389 = vadd.f32 0.0, %v388
      %v390 = vpop.f32.mrb[0].mxu0
      %391 = vdwg.mxu0
      %v392 = vadd.f32 %v151, %v330
      %v393 = vadd.f32 %v152, %v333
      %v394 = vadd.f32 %v153, %v338
      %v395 = vadd.f32 %v154, %v341
      %v396 = vadd.f32 %v155, %v346
      %v397 = vadd.f32 %v156, %v349
      %v398 = vadd.f32 %v157, %v354
      %v399 = vadd.f32 %v158, %v357
      %v400 = vadd.f32 %v159, %v362
      %v401 = vadd.f32 %v160, %v365
      %v402 = vadd.f32 %v161, %v370
      %v403 = vadd.f32 %v162, %v373
      %v404 = vadd.f32 %v163, %v378
      %v405 = vadd.f32 %v164, %v381
      %v406 = vadd.f32 %v165, %v386
      %v407 = vadd.f32 %v166, %v389
      %408 = vst [vmem:[#allocation2] sm:$0xff] %v392
      %409 = vst [vmem:[#allocation2 + $0x8] sm:$0xff] %v393
      %410 = vst [vmem:[#allocation2 + $0x10] sm:$0xff] %v394
      %411 = vst [vmem:[#allocation2 + $0x18] sm:$0xff] %v395
      %412 = vst [vmem:[#allocation2 + $0x20] sm:$0xff] %v396
      %413 = vst [vmem:[#allocation2 + $0x28] sm:$0xff] %v397
      %414 = vst [vmem:[#allocation2 + $0x30] sm:$0xff] %v398
      %415 = vst [vmem:[#allocation2 + $0x38] sm:$0xff] %v399
      %416 = vst [vmem:[#allocation2 + $0x40] sm:$0xff] %v400
      %417 = vst [vmem:[#allocation2 + $0x48] sm:$0xff] %v401
      %418 = vst [vmem:[#allocation2 + $0x50] sm:$0xff] %v402
      %419 = vst [vmem:[#allocation2 + $0x58] sm:$0xff] %v403
      %420 = vst [vmem:[#allocation2 + $0x60] sm:$0xff] %v404
      %421 = vst [vmem:[#allocation2 + $0x68] sm:$0xff] %v405
      %422 = vst [vmem:[#allocation2 + $0x70] sm:$0xff] %v406
      %423 = vst [vmem:[#allocation2 + $0x78] sm:$0xff] %v407
    $region65: #{tpu_custom_call.1} parent=1 // pred_fallthru
      _
    // Predicated region
    $region66: #{tpu_custom_call.1} parent=1 // pred_check
      %p424 = pneg %p123
    $region67: #{tpu_custom_call.1} parent=1 // pred_check_branch
      %426 = sbr.rel (%p424) target = $region69
    $region68: #{tpu_custom_call.1} parent=1 // pred_region
      %v427 = vld [vmem:[#allocation2] sm:$0xff]
      %v428 = vld [vmem:[#allocation2 + $0x8] sm:$0xff]
      %v429 = vld [vmem:[#allocation2 + $0x10] sm:$0xff]
      %v430 = vld [vmem:[#allocation2 + $0x18] sm:$0xff]
      %v431 = vld [vmem:[#allocation2 + $0x20] sm:$0xff]
      %v432 = vld [vmem:[#allocation2 + $0x28] sm:$0xff]
      %v433 = vld [vmem:[#allocation2 + $0x30] sm:$0xff]
      %v434 = vld [vmem:[#allocation2 + $0x38] sm:$0xff]
      %v435 = vld [vmem:[#allocation2 + $0x40] sm:$0xff]
      %v436 = vld [vmem:[#allocation2 + $0x48] sm:$0xff]
      %v437 = vld [vmem:[#allocation2 + $0x50] sm:$0xff]
      %v438 = vld [vmem:[#allocation2 + $0x58] sm:$0xff]
      %v439 = vld [vmem:[#allocation2 + $0x60] sm:$0xff]
      %v440 = vld [vmem:[#allocation2 + $0x68] sm:$0xff]
      %v441 = vld [vmem:[#allocation2 + $0x70] sm:$0xff]
      %v442 = vld [vmem:[#allocation2 + $0x78] sm:$0xff]
      %v443 = vpack.c.bf16 %v428, %v427
      %v444 = vpack.c.bf16 %v430, %v429
      %v445 = vpack.c.bf16 %v432, %v431
      %v446 = vpack.c.bf16 %v434, %v433
      %v447 = vpack.c.bf16 %v436, %v435
      %v448 = vpack.c.bf16 %v438, %v437
      %v449 = vpack.c.bf16 %v440, %v439
      %v450 = vpack.c.bf16 %v442, %v441
      %v451 = vld [vmem:[#allocation11] sm:$0xf]
      %v452 = vld [vmem:[#allocation11 + $0x4] sm:$0xf]
      %v453 = vld [vmem:[#allocation11 + $0x8] sm:$0xf]
      %v454 = vld [vmem:[#allocation11 + $0xc] sm:$0xf]
      %v455 = vld [vmem:[#allocation11 + $0x10] sm:$0xf]
      %v456 = vld [vmem:[#allocation11 + $0x14] sm:$0xf]
      %v457 = vld [vmem:[#allocation11 + $0x18] sm:$0xf]
      %v458 = vld [vmem:[#allocation11 + $0x1c] sm:$0xf]
      %v459 = vld [vmem:[#allocation11 + $0x20] sm:$0xf]
      %v460 = vld [vmem:[#allocation11 + $0x24] sm:$0xf]
      %v461 = vld [vmem:[#allocation11 + $0x28] sm:$0xf]
      %v462 = vld [vmem:[#allocation11 + $0x2c] sm:$0xf]
      %v463 = vld [vmem:[#allocation11 + $0x30] sm:$0xf]
      %v464 = vld [vmem:[#allocation11 + $0x34] sm:$0xf]
      %v465 = vld [vmem:[#allocation11 + $0x38] sm:$0xf]
      %v466 = vld [vmem:[#allocation11 + $0x3c] sm:$0xf]
      %v467 = vld [vmem:[#allocation10] sm:$0xf]
      %v468 = vld [vmem:[#allocation10 + $0x4] sm:$0xf]
      %v469 = vld [vmem:[#allocation10 + $0x8] sm:$0xf]
      %v470 = vld [vmem:[#allocation10 + $0xc] sm:$0xf]
      %v471 = vld [vmem:[#allocation10 + $0x10] sm:$0xf]
      %v472 = vld [vmem:[#allocation10 + $0x14] sm:$0xf]
      %v473 = vld [vmem:[#allocation10 + $0x18] sm:$0xf]
      %v474 = vld [vmem:[#allocation10 + $0x1c] sm:$0xf]
      %v475 = vld [vmem:[#allocation10 + $0x20] sm:$0xf]
      %v476 = vld [vmem:[#allocation10 + $0x24] sm:$0xf]
      %v477 = vld [vmem:[#allocation10 + $0x28] sm:$0xf]
      %v478 = vld [vmem:[#allocation10 + $0x2c] sm:$0xf]
      %v479 = vld [vmem:[#allocation10 + $0x30] sm:$0xf]
      %v480 = vld [vmem:[#allocation10 + $0x34] sm:$0xf]
      %v481 = vld [vmem:[#allocation10 + $0x38] sm:$0xf]
      %v482 = vld [vmem:[#allocation10 + $0x3c] sm:$0xf]
      %v483 = vld [vmem:[#allocation13] sm:$0xf]
      %v484 = vld [vmem:[#allocation13 + $0x4] sm:$0xf]
      %v485 = vld [vmem:[#allocation13 + $0x8] sm:$0xf]
      %v486 = vld [vmem:[#allocation13 + $0xc] sm:$0xf]
      %v487 = vld [vmem:[#allocation13 + $0x10] sm:$0xf]
      %v488 = vld [vmem:[#allocation13 + $0x14] sm:$0xf]
      %v489 = vld [vmem:[#allocation13 + $0x18] sm:$0xf]
      %v490 = vld [vmem:[#allocation13 + $0x1c] sm:$0xf]
      %v491 = vld [vmem:[#allocation13 + $0x20] sm:$0xf]
      %v492 = vld [vmem:[#allocation13 + $0x24] sm:$0xf]
      %v493 = vld [vmem:[#allocation13 + $0x28] sm:$0xf]
      %v494 = vld [vmem:[#allocation13 + $0x2c] sm:$0xf]
      %v495 = vld [vmem:[#allocation13 + $0x30] sm:$0xf]
      %v496 = vld [vmem:[#allocation13 + $0x34] sm:$0xf]
      %v497 = vld [vmem:[#allocation13 + $0x38] sm:$0xf]
      %v498 = vld [vmem:[#allocation13 + $0x3c] sm:$0xf]
      %v515 = vunpack.c.l.b16 %v467
      %v516 = vunpack.c.l.b16 %v468
      %v517 = vunpack.c.l.b16 %v469
      %v518 = vunpack.c.l.b16 %v470
      %v519 = vunpack.c.l.b16 %v471
      %v520 = vunpack.c.l.b16 %v472
      %v521 = vunpack.c.l.b16 %v473
      %v522 = vunpack.c.l.b16 %v474
      %v523 = vunpack.c.l.b16 %v475
      %v524 = vunpack.c.l.b16 %v476
      %v525 = vunpack.c.l.b16 %v477
      %v526 = vunpack.c.l.b16 %v478
      %v527 = vunpack.c.l.b16 %v479
      %v528 = vunpack.c.l.b16 %v480
      %v529 = vunpack.c.l.b16 %v481
      %v530 = vunpack.c.l.b16 %v482
      %v531 = vpack.c.b16 %v516, %v515
      %v532 = vpack.c.b16 %v518, %v517
      %v533 = vpack.c.b16 %v520, %v519
      %v534 = vpack.c.b16 %v522, %v521
      %v535 = vpack.c.b16 %v524, %v523
      %v536 = vpack.c.b16 %v526, %v525
      %v537 = vpack.c.b16 %v528, %v527
      %v538 = vpack.c.b16 %v530, %v529
      %v563 = vunpack.c.l.b16 %v483
      %v564 = vunpack.c.l.b16 %v484
      %v565 = vunpack.c.l.b16 %v485
      %v566 = vunpack.c.l.b16 %v486
      %v567 = vunpack.c.l.b16 %v487
      %v568 = vunpack.c.l.b16 %v488
      %v569 = vunpack.c.l.b16 %v489
      %v570 = vunpack.c.l.b16 %v490
      %v571 = vunpack.c.l.b16 %v491
      %v572 = vunpack.c.l.b16 %v492
      %v573 = vunpack.c.l.b16 %v493
      %v574 = vunpack.c.l.b16 %v494
      %v575 = vunpack.c.l.b16 %v495
      %v576 = vunpack.c.l.b16 %v496
      %v577 = vunpack.c.l.b16 %v497
      %v578 = vunpack.c.l.b16 %v498
      %v579 = vpack.c.b16 %v564, %v563
      %v580 = vpack.c.b16 %v566, %v565
      %v581 = vpack.c.b16 %v568, %v567
      %v582 = vpack.c.b16 %v570, %v569
      %v583 = vpack.c.b16 %v572, %v571
      %v584 = vpack.c.b16 %v574, %v573
      %v585 = vpack.c.b16 %v576, %v575
      %v586 = vpack.c.b16 %v578, %v577
      %595 = vmatprep.subr.bf16.mxu0 0
      %596 = vmatpush1.bf16.msra.mxu0 %v579
      %597 = vmatprep.subr.bf16.mxu0 0
      %598 = vmatpush1.bf16.msra.mxu0 %v580
      %599 = vmatprep.subr.bf16.mxu0 0
      %600 = vmatpush1.bf16.msra.mxu0 %v581
      %601 = vmatprep.subr.bf16.mxu0 0
      %602 = vmatpush1.bf16.msra.mxu0 %v582
      %603 = vmatprep.subr.bf16.mxu0 0
      %604 = vmatpush1.bf16.msra.mxu0 %v583
      %605 = vmatprep.subr.bf16.mxu0 0
      %606 = vmatpush1.bf16.msra.mxu0 %v584
      %607 = vmatprep.subr.bf16.mxu0 0
      %608 = vmatpush1.bf16.msra.mxu0 %v585
      %609 = vmatprep.subr.bf16.mxu0 0
      %610 = vmatpush1.bf16.msra.mxu0 %v586
      %611 = vmatprep.subr.bf16.mxu0 0
      %612 = vmatpush1.bf16.msra.mxu0 0
      %613 = vmatprep.subr.bf16.mxu0 0
      %614 = vmatpush1.bf16.msra.mxu0 0
      %615 = vmatprep.subr.bf16.mxu0 0
      %616 = vmatpush1.bf16.msra.mxu0 0
      %617 = vmatprep.subr.bf16.mxu0 0
      %618 = vmatpush1.bf16.msra.mxu0 0
      %619 = vmatprep.subr.bf16.mxu0 0
      %620 = vmatpush1.bf16.msra.mxu0 0
      %621 = vmatprep.subr.bf16.mxu0 0
      %622 = vmatpush1.bf16.msra.mxu0 0
      %623 = vmatprep.subr.bf16.mxu0 0
      %624 = vmatpush1.bf16.msra.mxu0 0
      %625 = vmatprep.subr.bf16.mxu0 0
      %626 = vmatpush1.bf16.msra.mxu0 0
      %627 = vmatprep.mubr.bf16.mxu0 0
      %628 = vmatmul.mubr.bf16.gmra.mrb[0].mxu0 %v531
      %v629 = vpop.f32.mrb[0].mxu0
      %v630 = vadd.f32 0.0, %v629
      %v631 = vpop.f32.mrb[0].mxu0
      %v632 = vpop.f32.mrb[0].mxu0
      %v633 = vadd.f32 0.0, %v632
      %v634 = vpop.f32.mrb[0].mxu0
      %635 = vmatprep.mubr.bf16.mxu0 0
      %636 = vmatmul.mubr.bf16.gmra.mrb[0].mxu0 %v532
      %v637 = vpop.f32.mrb[0].mxu0
      %v638 = vadd.f32 0.0, %v637
      %v639 = vpop.f32.mrb[0].mxu0
      %v640 = vpop.f32.mrb[0].mxu0
      %v641 = vadd.f32 0.0, %v640
      %v642 = vpop.f32.mrb[0].mxu0
      %643 = vmatprep.mubr.bf16.mxu0 0
      %644 = vmatmul.mubr.bf16.gmra.mrb[0].mxu0 %v533
      %v645 = vpop.f32.mrb[0].mxu0
      %v646 = vadd.f32 0.0, %v645
      %v647 = vpop.f32.mrb[0].mxu0
      %v648 = vpop.f32.mrb[0].mxu0
      %v649 = vadd.f32 0.0, %v648
      %v650 = vpop.f32.mrb[0].mxu0
      %651 = vmatprep.mubr.bf16.mxu0 0
      %652 = vmatmul.mubr.bf16.gmra.mrb[0].mxu0 %v534
      %v653 = vpop.f32.mrb[0].mxu0
      %v654 = vadd.f32 0.0, %v653
      %v655 = vpop.f32.mrb[0].mxu0
      %v656 = vpop.f32.mrb[0].mxu0
      %v657 = vadd.f32 0.0, %v656
      %v658 = vpop.f32.mrb[0].mxu0
      %659 = vmatprep.mubr.bf16.mxu0 0
      %660 = vmatmul.mubr.bf16.gmra.mrb[0].mxu0 %v535
      %v661 = vpop.f32.mrb[0].mxu0
      %v662 = vadd.f32 0.0, %v661
      %v663 = vpop.f32.mrb[0].mxu0
      %v664 = vpop.f32.mrb[0].mxu0
      %v665 = vadd.f32 0.0, %v664
      %v666 = vpop.f32.mrb[0].mxu0
      %667 = vmatprep.mubr.bf16.mxu0 0
      %668 = vmatmul.mubr.bf16.gmra.mrb[0].mxu0 %v536
      %v669 = vpop.f32.mrb[0].mxu0
      %v670 = vadd.f32 0.0, %v669
      %v671 = vpop.f32.mrb[0].mxu0
      %v672 = vpop.f32.mrb[0].mxu0
      %v673 = vadd.f32 0.0, %v672
      %v674 = vpop.f32.mrb[0].mxu0
      %675 = vmatprep.mubr.bf16.mxu0 0
      %676 = vmatmul.mubr.bf16.gmra.mrb[0].mxu0 %v537
      %v677 = vpop.f32.mrb[0].mxu0
      %v678 = vadd.f32 0.0, %v677
      %v679 = vpop.f32.mrb[0].mxu0
      %v680 = vpop.f32.mrb[0].mxu0
      %v681 = vadd.f32 0.0, %v680
      %v682 = vpop.f32.mrb[0].mxu0
      %683 = vmatprep.mubr.bf16.mxu0 0
      %684 = vmatmul.mubr.bf16.gmra.mrb[0].mxu0 %v538
      %v685 = vpop.f32.mrb[0].mxu0
      %v686 = vadd.f32 0.0, %v685
      %v687 = vpop.f32.mrb[0].mxu0
      %v688 = vpop.f32.mrb[0].mxu0
      %v689 = vadd.f32 0.0, %v688
      %v690 = vpop.f32.mrb[0].mxu0
      %691 = vdwg.mxu0
      %v708 = vunpack.c.l.b16 %v451
      %v709 = vunpack.c.l.b16 %v452
      %v710 = vunpack.c.l.b16 %v453
      %v711 = vunpack.c.l.b16 %v454
      %v712 = vunpack.c.l.b16 %v455
      %v713 = vunpack.c.l.b16 %v456
      %v714 = vunpack.c.l.b16 %v457
      %v715 = vunpack.c.l.b16 %v458
      %v716 = vunpack.c.l.b16 %v459
      %v717 = vunpack.c.l.b16 %v460
      %v718 = vunpack.c.l.b16 %v461
      %v719 = vunpack.c.l.b16 %v462
      %v720 = vunpack.c.l.b16 %v463
      %v721 = vunpack.c.l.b16 %v464
      %v722 = vunpack.c.l.b16 %v465
      %v723 = vunpack.c.l.b16 %v466
      %v724 = vpack.c.b16 %v709, %v708
      %v725 = vpack.c.b16 %v711, %v710
      %v726 = vpack.c.b16 %v713, %v712
      %v727 = vpack.c.b16 %v715, %v714
      %v728 = vpack.c.b16 %v717, %v716
      %v729 = vpack.c.b16 %v719, %v718
      %v730 = vpack.c.b16 %v721, %v720
      %v731 = vpack.c.b16 %v723, %v722
      %740 = vmatprep.subr.bf16.mxu0 0
      %741 = vmatpush1.bf16.msra.mxu0 %v724
      %742 = vmatprep.subr.bf16.mxu0 0
      %743 = vmatpush1.bf16.msra.mxu0 %v725
      %744 = vmatprep.subr.bf16.mxu0 0
      %745 = vmatpush1.bf16.msra.mxu0 %v726
      %746 = vmatprep.subr.bf16.mxu0 0
      %747 = vmatpush1.bf16.msra.mxu0 %v727
      %748 = vmatprep.subr.bf16.mxu0 0
      %749 = vmatpush1.bf16.msra.mxu0 %v728
      %750 = vmatprep.subr.bf16.mxu0 0
      %751 = vmatpush1.bf16.msra.mxu0 %v729
      %752 = vmatprep.subr.bf16.mxu0 0
      %753 = vmatpush1.bf16.msra.mxu0 %v730
      %754 = vmatprep.subr.bf16.mxu0 0
      %755 = vmatpush1.bf16.msra.mxu0 %v731
      %756 = vmatprep.subr.bf16.mxu0 0
      %757 = vmatpush1.bf16.msra.mxu0 0
      %758 = vmatprep.subr.bf16.mxu0 0
      %759 = vmatpush1.bf16.msra.mxu0 0
      %760 = vmatprep.subr.bf16.mxu0 0
      %761 = vmatpush1.bf16.msra.mxu0 0
      %762 = vmatprep.subr.bf16.mxu0 0
      %763 = vmatpush1.bf16.msra.mxu0 0
      %764 = vmatprep.subr.bf16.mxu0 0
      %765 = vmatpush1.bf16.msra.mxu0 0
      %766 = vmatprep.subr.bf16.mxu0 0
      %767 = vmatpush1.bf16.msra.mxu0 0
      %768 = vmatprep.subr.bf16.mxu0 0
      %769 = vmatpush1.bf16.msra.mxu0 0
      %770 = vmatprep.subr.bf16.mxu0 0
      %771 = vmatpush1.bf16.msra.mxu0 0
      %772 = vmatprep.mubr.bf16.mxu0 0
      %773 = vmatmul.mubr.bf16.gmra.mrb[0].mxu0 %v443
      %v774 = vpop.f32.mrb[0].mxu0
      %v775 = vadd.f32 %v630, %v774
      %v776 = vpop.f32.mrb[0].mxu0
      %v777 = vpop.f32.mrb[0].mxu0
      %v778 = vadd.f32 %v633, %v777
      %v779 = vpop.f32.mrb[0].mxu0
      %780 = vmatprep.mubr.bf16.mxu0 0
      %781 = vmatmul.mubr.bf16.gmra.mrb[0].mxu0 %v444
      %v782 = vpop.f32.mrb[0].mxu0
      %v783 = vadd.f32 %v638, %v782
      %v784 = vpop.f32.mrb[0].mxu0
      %v785 = vpop.f32.mrb[0].mxu0
      %v786 = vadd.f32 %v641, %v785
      %v787 = vpop.f32.mrb[0].mxu0
      %788 = vmatprep.mubr.bf16.mxu0 0
      %789 = vmatmul.mubr.bf16.gmra.mrb[0].mxu0 %v445
      %v790 = vpop.f32.mrb[0].mxu0
      %v791 = vadd.f32 %v646, %v790
      %v792 = vpop.f32.mrb[0].mxu0
      %v793 = vpop.f32.mrb[0].mxu0
      %v794 = vadd.f32 %v649, %v793
      %v795 = vpop.f32.mrb[0].mxu0
      %796 = vmatprep.mubr.bf16.mxu0 0
      %797 = vmatmul.mubr.bf16.gmra.mrb[0].mxu0 %v446
      %v798 = vpop.f32.mrb[0].mxu0
      %v799 = vadd.f32 %v654, %v798
      %v800 = vpop.f32.mrb[0].mxu0
      %v801 = vpop.f32.mrb[0].mxu0
      %v802 = vadd.f32 %v657, %v801
      %v803 = vpop.f32.mrb[0].mxu0
      %804 = vmatprep.mubr.bf16.mxu0 0
      %805 = vmatmul.mubr.bf16.gmra.mrb[0].mxu0 %v447
      %v806 = vpop.f32.mrb[0].mxu0
      %v807 = vadd.f32 %v662, %v806
      %v808 = vpop.f32.mrb[0].mxu0
      %v809 = vpop.f32.mrb[0].mxu0
      %v810 = vadd.f32 %v665, %v809
      %v811 = vpop.f32.mrb[0].mxu0
      %812 = vmatprep.mubr.bf16.mxu0 0
      %813 = vmatmul.mubr.bf16.gmra.mrb[0].mxu0 %v448
      %v814 = vpop.f32.mrb[0].mxu0
      %v815 = vadd.f32 %v670, %v814
      %v816 = vpop.f32.mrb[0].mxu0
      %v817 = vpop.f32.mrb[0].mxu0
      %v818 = vadd.f32 %v673, %v817
      %v819 = vpop.f32.mrb[0].mxu0
      %820 = vmatprep.mubr.bf16.mxu0 0
      %821 = vmatmul.mubr.bf16.gmra.mrb[0].mxu0 %v449
      %v822 = vpop.f32.mrb[0].mxu0
      %v823 = vadd.f32 %v678, %v822
      %v824 = vpop.f32.mrb[0].mxu0
      %v825 = vpop.f32.mrb[0].mxu0
      %v826 = vadd.f32 %v681, %v825
      %v827 = vpop.f32.mrb[0].mxu0
      %828 = vmatprep.mubr.bf16.mxu0 0
      %829 = vmatmul.mubr.bf16.gmra.mrb[0].mxu0 %v450
      %v830 = vpop.f32.mrb[0].mxu0
      %v831 = vadd.f32 %v686, %v830
      %v832 = vpop.f32.mrb[0].mxu0
      %v833 = vpop.f32.mrb[0].mxu0
      %v834 = vadd.f32 %v689, %v833
      %v835 = vpop.f32.mrb[0].mxu0
      %836 = vdwg.mxu0
      %v837 = vld [vmem:[#allocation14] sm:$0x1]
      %v839 = vlaneseq
      %v840 = vshrl.u32 %v839, 7
      %v841 = vsub.s32 0, %v840
      %v842 = vrot.slane %v837, %v841
      %v844 = vadd.f32 %v775, %v842
      %v845 = vadd.f32 %v778, %v842
      %v846 = vadd.f32 %v783, %v842
      %v847 = vadd.f32 %v786, %v842
      %v848 = vadd.f32 %v791, %v842
      %v849 = vadd.f32 %v794, %v842
      %v850 = vadd.f32 %v799, %v842
      %v851 = vadd.f32 %v802, %v842
      %v852 = vadd.f32 %v807, %v842
      %v853 = vadd.f32 %v810, %v842
      %v854 = vadd.f32 %v815, %v842
      %v855 = vadd.f32 %v818, %v842
      %v856 = vadd.f32 %v823, %v842
      %v857 = vadd.f32 %v826, %v842
      %v858 = vadd.f32 %v831, %v842
      %v859 = vadd.f32 %v834, %v842
      %vm860 = vcmp.gt.f32.partialorder %v844, 0.0
      %vm861 = vcmp.gt.f32.partialorder %v845, 0.0
      %vm862 = vcmp.gt.f32.partialorder %v846, 0.0
      %vm863 = vcmp.gt.f32.partialorder %v847, 0.0
      %vm864 = vcmp.gt.f32.partialorder %v848, 0.0
      %vm865 = vcmp.gt.f32.partialorder %v849, 0.0
      %vm866 = vcmp.gt.f32.partialorder %v850, 0.0
      %vm867 = vcmp.gt.f32.partialorder %v851, 0.0
      %vm868 = vcmp.gt.f32.partialorder %v852, 0.0
      %vm869 = vcmp.gt.f32.partialorder %v853, 0.0
      %vm870 = vcmp.gt.f32.partialorder %v854, 0.0
      %vm871 = vcmp.gt.f32.partialorder %v855, 0.0
      %vm872 = vcmp.gt.f32.partialorder %v856, 0.0
      %vm873 = vcmp.gt.f32.partialorder %v857, 0.0
      %vm874 = vcmp.gt.f32.partialorder %v858, 0.0
      %vm875 = vcmp.gt.f32.partialorder %v859, 0.0
      %v876 = vmul.f32 %v844, 1.442695
      %v877 = vpow.pop %v876
      %v878 = vmul.f32 %v845, 1.442695
      %v879 = vpow.pop %v878
      %v880 = vmul.f32 %v846, 1.442695
      %v881 = vpow.pop %v880
      %v882 = vmul.f32 %v847, 1.442695
      %v883 = vpow.pop %v882
      %v884 = vmul.f32 %v848, 1.442695
      %v885 = vpow.pop %v884
      %v886 = vmul.f32 %v849, 1.442695
      %v887 = vpow.pop %v886
      %v888 = vmul.f32 %v850, 1.442695
      %v889 = vpow.pop %v888
      %v890 = vmul.f32 %v851, 1.442695
      %v891 = vpow.pop %v890
      %v892 = vmul.f32 %v852, 1.442695
      %v893 = vpow.pop %v892
      %v894 = vmul.f32 %v853, 1.442695
      %v895 = vpow.pop %v894
      %v896 = vmul.f32 %v854, 1.442695
      %v897 = vpow.pop %v896
      %v898 = vmul.f32 %v855, 1.442695
      %v899 = vpow.pop %v898
      %v900 = vmul.f32 %v856, 1.442695
      %v901 = vpow.pop %v900
      %v902 = vmul.f32 %v857, 1.442695
      %v903 = vpow.pop %v902
      %v904 = vmul.f32 %v858, 1.442695
      %v905 = vpow.pop %v904
      %v906 = vmul.f32 %v859, 1.442695
      %v907 = vpow.pop %v906
      %v908 = vsub.f32 %v877, 1.0
      %v909 = vsub.f32 %v879, 1.0
      %v910 = vsub.f32 %v881, 1.0
      %v911 = vsub.f32 %v883, 1.0
      %v912 = vsub.f32 %v885, 1.0
      %v913 = vsub.f32 %v887, 1.0
      %v914 = vsub.f32 %v889, 1.0
      %v915 = vsub.f32 %v891, 1.0
      %v916 = vsub.f32 %v893, 1.0
      %v917 = vsub.f32 %v895, 1.0
      %v918 = vsub.f32 %v897, 1.0
      %v919 = vsub.f32 %v899, 1.0
      %v920 = vsub.f32 %v901, 1.0
      %v921 = vsub.f32 %v903, 1.0
      %v922 = vsub.f32 %v905, 1.0
      %v923 = vsub.f32 %v907, 1.0
      %v924 = vsel %vm860, %v844, %v908
      %v925 = vsel %vm861, %v845, %v909
      %v926 = vsel %vm862, %v846, %v910
      %v927 = vsel %vm863, %v847, %v911
      %v928 = vsel %vm864, %v848, %v912
      %v929 = vsel %vm865, %v849, %v913
      %v930 = vsel %vm866, %v850, %v914
      %v931 = vsel %vm867, %v851, %v915
      %v932 = vsel %vm868, %v852, %v916
      %v933 = vsel %vm869, %v853, %v917
      %v934 = vsel %vm870, %v854, %v918
      %v935 = vsel %vm871, %v855, %v919
      %v936 = vsel %vm872, %v856, %v920
      %v937 = vsel %vm873, %v857, %v921
      %v938 = vsel %vm874, %v858, %v922
      %v939 = vsel %vm875, %v859, %v923
      %v940 = vld [vmem:[#allocation16] sm:$0xff]
      %v941 = vld [vmem:[#allocation16 + $0x8] sm:$0xff]
      %v942 = vld [vmem:[#allocation16 + $0x10] sm:$0xff]
      %v943 = vld [vmem:[#allocation16 + $0x18] sm:$0xff]
      %v944 = vld [vmem:[#allocation16 + $0x20] sm:$0xff]
      %v945 = vld [vmem:[#allocation16 + $0x28] sm:$0xff]
      %v946 = vld [vmem:[#allocation16 + $0x30] sm:$0xff]
      %v947 = vld [vmem:[#allocation16 + $0x38] sm:$0xff]
      %v948 = vld [vmem:[#allocation16 + $0x40] sm:$0xff]
      %v949 = vld [vmem:[#allocation16 + $0x48] sm:$0xff]
      %v950 = vld [vmem:[#allocation16 + $0x50] sm:$0xff]
      %v951 = vld [vmem:[#allocation16 + $0x58] sm:$0xff]
      %v952 = vld [vmem:[#allocation16 + $0x60] sm:$0xff]
      %v953 = vld [vmem:[#allocation16 + $0x68] sm:$0xff]
      %v954 = vld [vmem:[#allocation16 + $0x70] sm:$0xff]
      %v955 = vld [vmem:[#allocation16 + $0x78] sm:$0xff]
      %v956 = vmul.f32 %v924, %v940
      %v957 = vmul.f32 %v925, %v941
      %v958 = vmul.f32 %v926, %v942
      %v959 = vmul.f32 %v927, %v943
      %v960 = vmul.f32 %v928, %v944
      %v961 = vmul.f32 %v929, %v945
      %v962 = vmul.f32 %v930, %v946
      %v963 = vmul.f32 %v931, %v947
      %v964 = vmul.f32 %v932, %v948
      %v965 = vmul.f32 %v933, %v949
      %v966 = vmul.f32 %v934, %v950
      %v967 = vmul.f32 %v935, %v951
      %v968 = vmul.f32 %v936, %v952
      %v969 = vmul.f32 %v937, %v953
      %v970 = vmul.f32 %v938, %v954
      %v971 = vmul.f32 %v939, %v955
      %v972 = vpack.c.bf16 %v957, %v956
      %v973 = vpack.c.bf16 %v959, %v958
      %v974 = vpack.c.bf16 %v961, %v960
      %v975 = vpack.c.bf16 %v963, %v962
      %v976 = vpack.c.bf16 %v965, %v964
      %v977 = vpack.c.bf16 %v967, %v966
      %v978 = vpack.c.bf16 %v969, %v968
      %v979 = vpack.c.bf16 %v971, %v970
      %v988 = vunpack.c.l.b16 %v972
      %v989 = vunpack.c.h.b16 %v972
      %v990 = vunpack.c.l.b16 %v973
      %v991 = vunpack.c.h.b16 %v973
      %v992 = vunpack.c.l.b16 %v974
      %v993 = vunpack.c.h.b16 %v974
      %v994 = vunpack.c.l.b16 %v975
      %v995 = vunpack.c.h.b16 %v975
      %v996 = vunpack.c.l.b16 %v976
      %v997 = vunpack.c.h.b16 %v976
      %v998 = vunpack.c.l.b16 %v977
      %v999 = vunpack.c.h.b16 %v977
      %v1000 = vunpack.c.l.b16 %v978
      %v1001 = vunpack.c.h.b16 %v978
      %v1002 = vunpack.c.l.b16 %v979
      %v1003 = vunpack.c.h.b16 %v979
      %v1004 = vpack.c.b16 %v988, %v988
      %v1005 = vpack.c.b16 %v989, %v989
      %v1006 = vpack.c.b16 %v990, %v990
      %v1007 = vpack.c.b16 %v991, %v991
      %v1008 = vpack.c.b16 %v992, %v992
      %v1009 = vpack.c.b16 %v993, %v993
      %v1010 = vpack.c.b16 %v994, %v994
      %v1011 = vpack.c.b16 %v995, %v995
      %v1012 = vpack.c.b16 %v996, %v996
      %v1013 = vpack.c.b16 %v997, %v997
      %v1014 = vpack.c.b16 %v998, %v998
      %v1015 = vpack.c.b16 %v999, %v999
      %v1016 = vpack.c.b16 %v1000, %v1000
      %v1017 = vpack.c.b16 %v1001, %v1001
      %v1018 = vpack.c.b16 %v1002, %v1002
      %v1019 = vpack.c.b16 %v1003, %v1003
      %1036 = vst [vmem:[#allocation17] sm:$0xf] %v1004
      %1037 = vst [vmem:[#allocation17 + $0x4] sm:$0xf] %v1005
      %1038 = vst [vmem:[#allocation17 + $0x8] sm:$0xf] %v1006
      %1039 = vst [vmem:[#allocation17 + $0xc] sm:$0xf] %v1007
      %1040 = vst [vmem:[#allocation17 + $0x10] sm:$0xf] %v1008
      %1041 = vst [vmem:[#allocation17 + $0x14] sm:$0xf] %v1009
      %1042 = vst [vmem:[#allocation17 + $0x18] sm:$0xf] %v1010
      %1043 = vst [vmem:[#allocation17 + $0x1c] sm:$0xf] %v1011
      %1044 = vst [vmem:[#allocation17 + $0x20] sm:$0xf] %v1012
      %1045 = vst [vmem:[#allocation17 + $0x24] sm:$0xf] %v1013
      %1046 = vst [vmem:[#allocation17 + $0x28] sm:$0xf] %v1014
      %1047 = vst [vmem:[#allocation17 + $0x2c] sm:$0xf] %v1015
      %1048 = vst [vmem:[#allocation17 + $0x30] sm:$0xf] %v1016
      %1049 = vst [vmem:[#allocation17 + $0x34] sm:$0xf] %v1017
      %1050 = vst [vmem:[#allocation17 + $0x38] sm:$0xf] %v1018
      %1051 = vst [vmem:[#allocation17 + $0x3c] sm:$0xf] %v1019
    $region69: #{tpu_custom_call.1} parent=1 // pred_fallthru
      _
    // Predicated region
    $region70: #{tpu_custom_call.1} parent=1 // pred_check
      _
    $region71: #{tpu_custom_call.1} parent=1 // pred_check_branch
      %1053 = sbr.rel (0) target = $region73
    $region72: #{tpu_custom_call.1} parent=1 // pred_region
      %s1055 = ssub.s32 1024, 1024
      %1056 = vsyncadd [#allocation7], %s1055
      %s1057 = sshll.u32 [#allocation17], 4
      %s1058 = int_to_ptr.vmem [resolvable:$true] %s1057
      %1063 = dma.vmem_to_hbm [thread:$0]  %s1058, 1024, %s8, [#allocation7], 64, 64, 4
    $region73: #{tpu_custom_call.1} parent=1 // pred_fallthru
      _
    // Predicated region
    $region74: #{tpu_custom_call.1} parent=1 // pred_check
      _
    $region75: #{tpu_custom_call.1} parent=1 // pred_check_branch
      %1065 = sbr.rel (0) target = $region77
    $region76: #{tpu_custom_call.1} parent=1 // pred_region
      %1066 = dma.done [#allocation7], 1024
    $region77: #{tpu_custom_call.1} parent=1 // pred_fallthru
      _
    %1067 = vsyncpa [#allocation6], 1
    %1068 = vsyncpa [#allocation9], 1
    %1069 = vsyncpa [#allocation12], 1
    %1070 = vsyncpa [#allocation15], 1
    %1071 = vsyncpa [#allocation7], 1

</llo_original>
